<compile_context>
chip_gen: v7x
topology: tpu7x:2x2x1
jax: 0.10.0
libtpu: 0.0.40
codegen_flags: <defaults>
</compile_context>

<pallas_src>
import jax
import jax.numpy as jnp
from jax.experimental import pallas as pl
from jax.experimental.pallas import tpu as pltpu


def _round_up(x, m):
    return ((x + m - 1) // m) * m


def _attention_kernel(di_ref, h_ref, we_ref, wh_ref, b_ref, enc_ref, out_ref):
    # Per-block shapes:
    #   di:(bB,E)  h:(bB,H)  we:(E,S)  wh:(H,S)  b:(1,S)  enc:(bB,S,D)  out:(bB,D)
    # concat + Linear expressed as the bit-equivalent split matmul.
    mix = (
        jnp.dot(di_ref[...], we_ref[...], preferred_element_type=jnp.float32)
        + jnp.dot(h_ref[...], wh_ref[...], preferred_element_type=jnp.float32)
        + b_ref[...]
    )                                                        # (bB, S)

    # softmax over the seq_len axis (dim=2 in the PyTorch code), exact f32.
    m = jnp.max(mix, axis=-1, keepdims=True)
    e = jnp.exp(mix - m)
    w = e / jnp.sum(e, axis=-1, keepdims=True)               # (bB, S)

    # bmm(weight.transpose(1,0), encoder_outputs): per batch a (1,S)x(S,D)
    # matmul.  Done as VPU broadcast-multiply + reduce over S (sublane axis)
    # so the mem-bound pipeline is not stalled on tiny MXU drains.
    out = jnp.sum(w[:, :, None] * enc_ref[...], axis=1)      # (bB, D)
    out_ref[...] = out.astype(out_ref.dtype)


def prepare_params(weight, bias, embed_size):
    """Hoisted once-per-model preprocessing of the nn.Linear parameters.

    weight: (S, H+E) PyTorch Linear weight (input order = [embed, hidden],
    matching the torch.cat order), bias: (S,).
    Returns we:(E,S), wh:(H,S), b:(1,S) so no transposes happen per decode step.
    """
    we = jnp.asarray(weight[:, :embed_size].T)               # (E, S)
    wh = jnp.asarray(weight[:, embed_size:].T)               # (H, S)
    b = jnp.asarray(bias).reshape(1, -1)                     # (1, S)
    return we, wh, b


def attention_forward(decoder_input, decoder_hidden, encoder_outputs,
                      we, wh, b, *, block_b=None):
    """decoder_input:(B,1,E) decoder_hidden:(L,B,H) encoder_outputs:(B,S,D)
    we:(E,S) wh:(H,S) b:(1,S)  ->  (B,1,D)"""
    B, _, E = decoder_input.shape
    H = decoder_hidden.shape[-1]
    S, D = encoder_outputs.shape[1], encoder_outputs.shape[2]

    di = decoder_input[:, 0, :]            # (B, E)  (== transpose(0,1), squeeze)
    h = decoder_hidden[0]                  # (B, H)

    # Batch tile: keep 2x (double-buffered) enc blocks comfortably under the
    # v7x 64 MiB physical VMEM and the 16/32 MiB scoped defaults on v5e/v6e.
    if block_b is None:
        enc_budget = 24 * 1024 * 1024                         # for 2 x enc block
        per_row = 2 * S * D * 4
        block_b = max(8, min(256, enc_budget // max(per_row, 1)))
        block_b = (block_b // 8) * 8                          # sublane aligned
    bB = int(min(block_b, _round_up(B, 8)))
    pB = _round_up(B, bB)

    if pB != B:
        pad = pB - B
        di = jnp.pad(di, ((0, pad), (0, 0)))
        h = jnp.pad(h, ((0, pad), (0, 0)))
        encoder_outputs = jnp.pad(encoder_outputs, ((0, pad), (0, 0), (0, 0)))

    grid = (pB // bB,)

    # Explicit VMEM budget: resident weights + double-buffered streamed blocks.
    resident = (E * S + H * S + S) * 4
    per_step = (bB * E + bB * H + bB * S * D + bB * D) * 4
    vmem_bytes = int(min(max(resident + 2 * per_step + (4 << 20), 16 << 20),
                         60 << 20))

    cost = pl.CostEstimate(
        flops=2 * pB * (E + H) * S + 2 * pB * S * D,
        transcendentals=pB * S,
        bytes_accessed=4 * (pB * S * D + pB * (E + H) + (E + H) * S + S + pB * D),
    )

    out = pl.pallas_call(
        _attention_kernel,
        out_shape=jax.ShapeDtypeStruct((pB, D), jnp.float32),
        grid=grid,
        in_specs=[
            pl.BlockSpec((bB, E), lambda i: (i, 0)),          # di
            pl.BlockSpec((bB, H), lambda i: (i, 0)),          # h
            pl.BlockSpec((E, S), lambda i: (0, 0)),           # we (resident)
            pl.BlockSpec((H, S), lambda i: (0, 0)),           # wh (resident)
            pl.BlockSpec((1, S), lambda i: (0, 0)),           # bias (resident)
            pl.BlockSpec((bB, S, D), lambda i: (i, 0, 0)),    # encoder_outputs
        ],
        out_specs=pl.BlockSpec((bB, D), lambda i: (i, 0)),
        compiler_params=pltpu.CompilerParams(
            dimension_semantics=("parallel",),
            vmem_limit_bytes=vmem_bytes,
        ),
        cost_estimate=cost,
    )(di, h, we, wh, b, encoder_outputs)

    return out[:B].reshape(B, 1, D)


def _reference(decoder_input, decoder_hidden, encoder_outputs, weight, bias):
    x = jnp.concatenate(
        [decoder_input[:, 0, :], decoder_hidden[0, :, :]], axis=-1
    )                                                        # (B, E+H)
    mix = x @ weight.T + bias                                # (B, S)
    w = jax.nn.softmax(mix, axis=-1)
    return jnp.einsum("bs,bsd->bd", w, encoder_outputs)[:, None, :]


if __name__ == "__main__":
    # Small, module-consistent shapes; S and D are lane-dense (multiples of 128).
    B, E, H, S, D, L = 8, 32, 32, 128, 128, 1

    key = jax.random.PRNGKey(0)
    k1, k2, k3, k4, k5 = jax.random.split(key, 5)

    decoder_input = jax.random.normal(k1, (B, 1, E), dtype=jnp.float32)
    decoder_hidden = jax.random.normal(k2, (L, B, H), dtype=jnp.float32)
    encoder_outputs = jax.random.normal(k3, (B, S, D), dtype=jnp.float32)

    # Deterministic Linear(hidden+embed -> seq_len) parameters.
    bound = 1.0 / jnp.sqrt(H + E)
    weight = jax.random.uniform(k4, (S, H + E), minval=-bound, maxval=bound,
                                dtype=jnp.float32)
    bias = jax.random.uniform(k5, (S,), minval=-bound, maxval=bound,
                              dtype=jnp.float32)

    # Hoisted once (not per decode step).
    we, wh, b = prepare_params(weight, bias, E)

    out = attention_forward(decoder_input, decoder_hidden, encoder_outputs,
                            we, wh, b)
    out = jax.block_until_ready(out)

    ref = _reference(decoder_input, decoder_hidden, encoder_outputs, weight, bias)
    assert out.shape == (B, 1, D)
    # Tolerance absorbs TPU default (bf16-pass) matmul precision on the tiny
    # projection; any structural error would be orders of magnitude larger.
    assert jnp.allclose(out, ref, atol=2e-3, rtol=2e-3), (
        float(jnp.max(jnp.abs(out - ref))))

    print("KERNEL_OK")
</pallas_src>

<mosaic_0001>
module attributes {stable_mosaic.version = 11 : i64} {
  func.func @_attention_kernel(%arg0: i32, %arg1: memref<8x32xf32, #tpu.memory_space<vmem>>, %arg2: memref<8x32xf32, #tpu.memory_space<vmem>>, %arg3: memref<32x128xf32, #tpu.memory_space<vmem>>, %arg4: memref<32x128xf32, #tpu.memory_space<vmem>>, %arg5: memref<1x128xf32, #tpu.memory_space<vmem>>, %arg6: memref<8x128x128xf32, #tpu.memory_space<vmem>>, %arg7: memref<8x128xf32, #tpu.memory_space<vmem>>) attributes {dimension_semantics = [#tpu.dimension_semantics<parallel>], iteration_bounds = array<i64: 1>, scalar_prefetch = 0 : i64, scratch_operands = 0 : i64, tpu.core_type = #tpu.core_type<tc>, window_params = [{transform_indices = @transform_0, window_bounds = array<i64: 8, 32>}, {transform_indices = @transform_1, window_bounds = array<i64: 8, 32>}, {pipeline_mode = #tpu.pipeline_mode<synchronous>, transform_indices = @transform_2, window_bounds = array<i64: 32, 128>}, {pipeline_mode = #tpu.pipeline_mode<synchronous>, transform_indices = @transform_3, window_bounds = array<i64: 32, 128>}, {pipeline_mode = #tpu.pipeline_mode<synchronous>, transform_indices = @transform_4, window_bounds = array<i64: 1, 128>}, {transform_indices = @transform_5, window_bounds = array<i64: 8, 128, 128>}, {transform_indices = @transform_6, window_bounds = array<i64: 8, 128>}]} {
    %c0 = arith.constant 0 : index
    %c0_0 = arith.constant 0 : index
    %0 = vector.load %arg1[%c0, %c0_0] : memref<8x32xf32, #tpu.memory_space<vmem>>, vector<8x32xf32>
    %c0_1 = arith.constant 0 : index
    %c0_2 = arith.constant 0 : index
    %1 = vector.load %arg3[%c0_1, %c0_2] : memref<32x128xf32, #tpu.memory_space<vmem>>, vector<32x128xf32>
    %cst = arith.constant dense<0.000000e+00> : vector<8x128xf32>
    %2 = tpu.matmul %0, %1, %cst {dimension_numbers = #tpu.dot_dimension_numbers<[1], [0], [0], [1], [0, 0, 1, 1], [], []>} : vector<8x32xf32>, vector<32x128xf32>, vector<8x128xf32> -> vector<8x128xf32>
    %c0_3 = arith.constant 0 : index
    %c0_4 = arith.constant 0 : index
    %3 = vector.load %arg2[%c0_3, %c0_4] : memref<8x32xf32, #tpu.memory_space<vmem>>, vector<8x32xf32>
    %c0_5 = arith.constant 0 : index
    %c0_6 = arith.constant 0 : index
    %4 = vector.load %arg4[%c0_5, %c0_6] : memref<32x128xf32, #tpu.memory_space<vmem>>, vector<32x128xf32>
    %cst_7 = arith.constant dense<0.000000e+00> : vector<8x128xf32>
    %5 = tpu.matmul %3, %4, %cst_7 {dimension_numbers = #tpu.dot_dimension_numbers<[1], [0], [0], [1], [0, 0, 1, 1], [], []>} : vector<8x32xf32>, vector<32x128xf32>, vector<8x128xf32> -> vector<8x128xf32>
    %6 = arith.addf %2, %5 : vector<8x128xf32>
    %c0_8 = arith.constant 0 : index
    %c0_9 = arith.constant 0 : index
    %7 = vector.load %arg5[%c0_8, %c0_9] : memref<1x128xf32, #tpu.memory_space<vmem>>, vector<1x128xf32>
    %8 = vector.broadcast %7 : vector<1x128xf32> to vector<8x128xf32>
    %9 = arith.addf %6, %8 : vector<8x128xf32>
    %cst_10 = arith.constant dense<0xFF800000> : vector<8xf32>
    %10 = vector.multi_reduction <maximumf>, %9, %cst_10 [1] : vector<8x128xf32> to vector<8xf32>
    %11 = vector.shape_cast %10 : vector<8xf32> to vector<8x1xf32>
    %12 = vector.broadcast %11 : vector<8x1xf32> to vector<8x128xf32>
    %13 = arith.subf %9, %12 : vector<8x128xf32>
    %14 = math.exp %13 : vector<8x128xf32>
    %cst_11 = arith.constant dense<0.000000e+00> : vector<8xf32>
    %15 = vector.multi_reduction <add>, %14, %cst_11 [1] : vector<8x128xf32> to vector<8xf32>
    %16 = vector.shape_cast %15 : vector<8xf32> to vector<8x1xf32>
    %17 = vector.broadcast %16 : vector<8x1xf32> to vector<8x128xf32>
    %18 = arith.divf %14, %17 : vector<8x128xf32>
    %19 = vector.shape_cast %18 : vector<8x128xf32> to vector<8x128x1xf32>
    %c0_12 = arith.constant 0 : index
    %c0_13 = arith.constant 0 : index
    %c0_14 = arith.constant 0 : index
    %20 = vector.load %arg6[%c0_12, %c0_13, %c0_14] : memref<8x128x128xf32, #tpu.memory_space<vmem>>, vector<8x128x128xf32>
    %21 = vector.broadcast %19 : vector<8x128x1xf32> to vector<8x128x128xf32>
    %22 = arith.mulf %21, %20 : vector<8x128x128xf32>
    %cst_15 = arith.constant dense<0.000000e+00> : vector<8x128xf32>
    %23 = vector.multi_reduction <add>, %22, %cst_15 [1] : vector<8x128x128xf32> to vector<8x128xf32>
    %c0_16 = arith.constant 0 : index
    %c0_17 = arith.constant 0 : index
    %24 = vector.load %arg7[%c0_16, %c0_17] : memref<8x128xf32, #tpu.memory_space<vmem>>, vector<8x128xf32>
    tpu.vector_store %arg7[%c0_16, %c0_17], %23 {strides = array<i32>} : memref<8x128xf32, #tpu.memory_space<vmem>>, vector<8x128xf32>,
    return
  }
  func.func @transform_0(%arg0: i32) -> (i32, i32) {
    %c0_i32 = arith.constant 0 : i32
    %c0_i32_0 = arith.constant 0 : i32
    return %arg0, %c0_i32 : i32, i32
  }
  func.func @transform_1(%arg0: i32) -> (i32, i32) {
    %c0_i32 = arith.constant 0 : i32
    %c0_i32_0 = arith.constant 0 : i32
    return %arg0, %c0_i32 : i32, i32
  }
  func.func @transform_2(%arg0: i32) -> (i32, i32) {
    %c0_i32 = arith.constant 0 : i32
    %c0_i32_0 = arith.constant 0 : i32
    %c0_i32_1 = arith.constant 0 : i32
    return %c0_i32, %c0_i32_0 : i32, i32
  }
  func.func @transform_3(%arg0: i32) -> (i32, i32) {
    %c0_i32 = arith.constant 0 : i32
    %c0_i32_0 = arith.constant 0 : i32
    %c0_i32_1 = arith.constant 0 : i32
    return %c0_i32, %c0_i32_0 : i32, i32
  }
  func.func @transform_4(%arg0: i32) -> (i32, i32) {
    %c0_i32 = arith.constant 0 : i32
    %c0_i32_0 = arith.constant 0 : i32
    %c0_i32_1 = arith.constant 0 : i32
    return %c0_i32, %c0_i32_0 : i32, i32
  }
  func.func @transform_5(%arg0: i32) -> (i32, i32, i32) {
    %c0_i32 = arith.constant 0 : i32
    %c0_i32_0 = arith.constant 0 : i32
    %c0_i32_1 = arith.constant 0 : i32
    return %arg0, %c0_i32, %c0_i32_0 : i32, i32, i32
  }
  func.func @transform_6(%arg0: i32) -> (i32, i32) {
    %c0_i32 = arith.constant 0 : i32
    %c0_i32_0 = arith.constant 0 : i32
    return %arg0, %c0_i32 : i32, i32
  }
}

</mosaic_0001>

<llo_original>
// kernel: tpu_custom_call.1
$region0: #{tpu_custom_call.1}
  #allocation0 [shape = 'u32[]', space=smem, size = 0x4, offset = 0x4, fixed_abs, tag = 'smem constant byte address 0x4 - core index']
  #allocation1 [shape = 'u32[144,128]{1,0:T(1,128)}', space=vmem, size = 0x12000, scoped, tag = 'internal scratch']
  %s0 = inlined_call_operand.hbm [shape: f32[8,32], index: 0, kind: input, shape index: {}]
  %s1 = inlined_call_operand.hbm [shape: f32[8,32], index: 1, kind: input, shape index: {}]
  %s2 = inlined_call_operand.hbm [shape: f32[32,128], index: 2, kind: input, shape index: {}]
  %s3 = inlined_call_operand.hbm [shape: f32[32,128], index: 3, kind: input, shape index: {}]
  %s4 = inlined_call_operand.vmem [shape: f32[1,128], index: 4, kind: input, shape index: {}]
  %s5 = inlined_call_operand.hbm [shape: f32[8,128,128], index: 5, kind: input, shape index: {}]
  %s6 = inlined_call_operand.hbm [shape: f32[8,128], index: 6, kind: output, shape index: {}]
  %s7 = sld [smem:[#allocation0]]
  $region54: #{tpu_custom_call.1} parent=0
    _
  %s9 = ssub.s32 1, %s7
  %s10 = scalar_select 0, %s9, %s7
  $region1: #{tpu_custom_call.1} parent=0
    #allocation2 [shape = 'u8[4096]{0}', space=vmem, size = 0x1000, scoped, tag = 'input window, operand 0, single buffered']
    #allocation3 [shape = 's32[1]{0}', space=sflag, size = 0x4, scoped, tag = 'scoped memory for tpu_custom_call.1']
    #allocation4 [shape = 's32[1]{0}', space=sflag, size = 0x4, scoped, tag = 'scoped memory for tpu_custom_call.1']
    #allocation5 [shape = 'u8[4096]{0}', space=vmem, size = 0x1000, scoped, tag = 'input window, operand 1, single buffered']
    #allocation6 [shape = 's32[1]{0}', space=sflag, size = 0x4, scoped, tag = 'scoped memory for tpu_custom_call.1']
    #allocation7 [shape = 'u8[16384]{0}', space=vmem, size = 0x4000, scoped, tag = 'input window, operand 2, single buffered']
    #allocation8 [shape = 'u8[16384]{0}', space=vmem, size = 0x4000, scoped, tag = 'input window, operand 3, single buffered']
    #allocation9 [shape = 's32[1]{0}', space=sflag, size = 0x4, scoped, tag = 'scoped memory for tpu_custom_call.1']
    #allocation10 [shape = 'u8[524288]{0}', space=vmem, size = 0x80000, scoped, tag = 'input window, operand 5, single buffered']
    #allocation11 [shape = 'u8[4096]{0}', space=vmem, size = 0x1000, scoped, tag = 'output window, operand 0, single buffered']
    %11 = vsyncpa [#allocation3], 0
    %12 = vsyncpa [#allocation6], 0
    %13 = vsyncpa [#allocation9], 0
    %14 = vsyncpa [#allocation4], 0
    // Predicated region
    $region2: #{tpu_custom_call.1} parent=1 // pred_check
      _
    $region3: #{tpu_custom_call.1} parent=1 // pred_check_branch
      %16 = sbr.rel (0) target = $region5
    $region4: #{tpu_custom_call.1} parent=1 // pred_region
      %s18 = ssub.s32 128, 128
      %19 = vsyncadd [#allocation3], %s18
      %s21 = sshll.u32 [#allocation2], 4
      %s22 = int_to_ptr.vmem [resolvable:$true] %s21
      %24 = dma.hbm_to_vmem [thread:$0]  %s0, 128, %s22, [#allocation3]
    $region5: #{tpu_custom_call.1} parent=1 // pred_fallthru
      _
    // Predicated region
    $region6: #{tpu_custom_call.1} parent=1 // pred_check
      _
    $region7: #{tpu_custom_call.1} parent=1 // pred_check_branch
      %26 = sbr.rel (0) target = $region9
    $region8: #{tpu_custom_call.1} parent=1 // pred_region
      %s28 = ssub.s32 128, 128
      %29 = vsyncadd [#allocation6], %s28
      %s31 = sshll.u32 [#allocation5], 4
      %s32 = int_to_ptr.vmem [resolvable:$true] %s31
      %34 = dma.hbm_to_vmem [thread:$0]  %s1, 128, %s32, [#allocation6]
    $region9: #{tpu_custom_call.1} parent=1 // pred_fallthru
      _
    // Predicated region
    $region10: #{tpu_custom_call.1} parent=1 // pred_check
      _
    $region11: #{tpu_custom_call.1} parent=1 // pred_check_branch
      %36 = sbr.rel (0) target = $region13
    $region12: #{tpu_custom_call.1} parent=1 // pred_region
      %s38 = ssub.s32 512, 512
      %39 = vsyncadd [#allocation6], %s38
      %s40 = sshll.u32 [#allocation7], 4
      %s41 = int_to_ptr.vmem [resolvable:$true] %s40
      %46 = dma.hbm_to_vmem [thread:$0]  %s2, 512, %s41, [#allocation6], 128, 128, 8
    $region13: #{tpu_custom_call.1} parent=1 // pred_fallthru
      _
    // Predicated region
    $region14: #{tpu_custom_call.1} parent=1 // pred_check
      _
    $region15: #{tpu_custom_call.1} parent=1 // pred_check_branch
      %48 = sbr.rel (0) target = $region17
    $region16: #{tpu_custom_call.1} parent=1 // pred_region
      %s50 = ssub.s32 512, 512
      %51 = vsyncadd [#allocation9], %s50
      %s52 = sshll.u32 [#allocation8], 4
      %s53 = int_to_ptr.vmem [resolvable:$true] %s52
      %58 = dma.hbm_to_vmem [thread:$0]  %s3, 512, %s53, [#allocation9], 128, 128, 8
    $region17: #{tpu_custom_call.1} parent=1 // pred_fallthru
      _
    // Predicated region
    $region18: #{tpu_custom_call.1} parent=1 // pred_check
      _
    $region19: #{tpu_custom_call.1} parent=1 // pred_check_branch
      %60 = sbr.rel (0) target = $region21
    $region20: #{tpu_custom_call.1} parent=1 // pred_region
      _
    $region21: #{tpu_custom_call.1} parent=1 // pred_fallthru
      _
    // Predicated region
    $region22: #{tpu_custom_call.1} parent=1 // pred_check
      _
    $region23: #{tpu_custom_call.1} parent=1 // pred_check_branch
      %62 = sbr.rel (0) target = $region25
    $region24: #{tpu_custom_call.1} parent=1 // pred_region
      %s64 = ssub.s32 16384, 16384
      %65 = vsyncadd [#allocation9], %s64
      %s66 = sshll.u32 [#allocation10], 4
      %s67 = int_to_ptr.vmem [resolvable:$true] %s66
      %72 = dma.hbm_to_vmem [thread:$0]  %s5, 16384, %s67, [#allocation9], 128, 128, 8
    $region25: #{tpu_custom_call.1} parent=1 // pred_fallthru
      _
    // Predicated region
    $region26: #{tpu_custom_call.1} parent=1 // pred_check
      _
    $region27: #{tpu_custom_call.1} parent=1 // pred_check_branch
      %74 = sbr.rel (0) target = $region29
    $region28: #{tpu_custom_call.1} parent=1 // pred_region
      %75 = dma.done [#allocation3], 128
    $region29: #{tpu_custom_call.1} parent=1 // pred_fallthru
      _
    // Predicated region
    $region30: #{tpu_custom_call.1} parent=1 // pred_check
      _
    $region31: #{tpu_custom_call.1} parent=1 // pred_check_branch
      %77 = sbr.rel (0) target = $region33
    $region32: #{tpu_custom_call.1} parent=1 // pred_region
      %78 = dma.done [#allocation6], 128
    $region33: #{tpu_custom_call.1} parent=1 // pred_fallthru
      _
    // Predicated region
    $region34: #{tpu_custom_call.1} parent=1 // pred_check
      _
    $region35: #{tpu_custom_call.1} parent=1 // pred_check_branch
      %80 = sbr.rel (0) target = $region37
    $region36: #{tpu_custom_call.1} parent=1 // pred_region
      %81 = dma.done [#allocation6], 512
    $region37: #{tpu_custom_call.1} parent=1 // pred_fallthru
      _
    // Predicated region
    $region38: #{tpu_custom_call.1} parent=1 // pred_check
      _
    $region39: #{tpu_custom_call.1} parent=1 // pred_check_branch
      %83 = sbr.rel (0) target = $region41
    $region40: #{tpu_custom_call.1} parent=1 // pred_region
      %84 = dma.done [#allocation9], 512
    $region41: #{tpu_custom_call.1} parent=1 // pred_fallthru
      _
    // Predicated region
    $region42: #{tpu_custom_call.1} parent=1 // pred_check
      _
    $region43: #{tpu_custom_call.1} parent=1 // pred_check_branch
      %86 = sbr.rel (0) target = $region45
    $region44: #{tpu_custom_call.1} parent=1 // pred_region
      %87 = dma.done [#allocation9], 16384
    $region45: #{tpu_custom_call.1} parent=1 // pred_fallthru
      _
    %v88 = vld [vmem:[#allocation2] sm:$0xff]
    %v89 = vld [vmem:[#allocation7] sm:$0xff]
    %v90 = vld [vmem:[#allocation7 + $0x8] sm:$0xff]
    %v91 = vld [vmem:[#allocation7 + $0x10] sm:$0xff]
    %v92 = vld [vmem:[#allocation7 + $0x18] sm:$0xff]
    %v93 = vld [vmem:[#allocation5] sm:$0xff]
    %v94 = vld [vmem:[#allocation8] sm:$0xff]
    %v95 = vld [vmem:[#allocation8 + $0x8] sm:$0xff]
    %v96 = vld [vmem:[#allocation8 + $0x10] sm:$0xff]
    %v97 = vld [vmem:[#allocation8 + $0x18] sm:$0xff]
    %vm98 = vcmask 261120
    %v100 = vsel %vm98, %v93, 0
    %102 = vmatprep.subr.mxu0 0.0
    %103 = vmatpush1.msra.mxu0 %v94
    %104 = vmatprep.subr.mxu0 0.0
    %105 = vmatpush1.msra.mxu0 %v95
    %106 = vmatprep.subr.mxu0 0.0
    %107 = vmatpush1.msra.mxu0 %v96
    %108 = vmatprep.subr.mxu0 0.0
    %109 = vmatpush1.msra.mxu0 %v97
    %110 = vmatprep.subr.mxu0 0.0
    %111 = vmatpush1.msra.mxu0 0.0
    %112 = vmatprep.subr.mxu0 0.0
    %113 = vmatpush1.msra.mxu0 0.0
    %114 = vmatprep.subr.mxu0 0.0
    %115 = vmatpush1.msra.mxu0 0.0
    %116 = vmatprep.subr.mxu0 0.0
    %117 = vmatpush1.msra.mxu0 0.0
    %118 = vmatprep.subr.mxu0 0.0
    %119 = vmatpush1.msra.mxu0 0.0
    %120 = vmatprep.subr.mxu0 0.0
    %121 = vmatpush1.msra.mxu0 0.0
    %122 = vmatprep.subr.mxu0 0.0
    %123 = vmatpush1.msra.mxu0 0.0
    %124 = vmatprep.subr.mxu0 0.0
    %125 = vmatpush1.msra.mxu0 0.0
    %126 = vmatprep.subr.mxu0 0.0
    %127 = vmatpush1.msra.mxu0 0.0
    %128 = vmatprep.subr.mxu0 0.0
    %129 = vmatpush1.msra.mxu0 0.0
    %130 = vmatprep.subr.mxu0 0.0
    %131 = vmatpush1.msra.mxu0 0.0
    %132 = vmatprep.subr.mxu0 0.0
    %133 = vmatpush1.msra.mxu0 0.0
    %134 = vmatprep.subr.mxu0 0.0
    %135 = vmatpush1.msra.mxu0 0.0
    %136 = vmatprep.subr.mxu0 0.0
    %137 = vmatpush1.msra.mxu0 0.0
    %138 = vmatprep.subr.mxu0 0.0
    %139 = vmatpush1.msra.mxu0 0.0
    %140 = vmatprep.subr.mxu0 0.0
    %141 = vmatpush1.msra.mxu0 0.0
    %142 = vmatprep.subr.mxu0 0.0
    %143 = vmatpush1.msra.mxu0 0.0
    %144 = vmatprep.subr.mxu0 0.0
    %145 = vmatpush1.msra.mxu0 0.0
    %146 = vmatprep.subr.mxu0 0.0
    %147 = vmatpush1.msra.mxu0 0.0
    %148 = vmatprep.subr.mxu0 0.0
    %149 = vmatpush1.msra.mxu0 0.0
    %150 = vmatprep.subr.mxu0 0.0
    %151 = vmatpush1.msra.mxu0 0.0
    %152 = vmatprep.subr.mxu0 0.0
    %153 = vmatpush1.msra.mxu0 0.0
    %154 = vmatprep.subr.mxu0 0.0
    %155 = vmatpush1.msra.mxu0 0.0
    %156 = vmatprep.subr.mxu0 0.0
    %157 = vmatpush1.msra.mxu0 0.0
    %158 = vmatprep.subr.mxu0 0.0
    %159 = vmatpush1.msra.mxu0 0.0
    %160 = vmatprep.subr.mxu0 0.0
    %161 = vmatpush1.msra.mxu0 0.0
    %162 = vmatprep.subr.mxu0 0.0
    %163 = vmatpush1.msra.mxu0 0.0
    %164 = vmatprep.subr.mxu0 0.0
    %165 = vmatpush1.msra.mxu0 0.0
    %166 = vmatprep.mubr.f32.mxu0 0.0
    %167 = vmatmul.mubr.f32.gmra.mrb[0].mxu0 %v100
    %v168 = vpop.f32.mrb[0].mxu0
    %v169 = vadd.f32 0.0, %v168
    %v170 = vpop.f32.mrb[0].mxu0
    %171 = vdwg.mxu0
    %v173 = vsel %vm98, %v88, 0
    %175 = vmatprep.subr.mxu0 0.0
    %176 = vmatpush1.msra.mxu0 %v89
    %177 = vmatprep.subr.mxu0 0.0
    %178 = vmatpush1.msra.mxu0 %v90
    %179 = vmatprep.subr.mxu0 0.0
    %180 = vmatpush1.msra.mxu0 %v91
    %181 = vmatprep.subr.mxu0 0.0
    %182 = vmatpush1.msra.mxu0 %v92
    %183 = vmatprep.subr.mxu0 0.0
    %184 = vmatpush1.msra.mxu0 0.0
    %185 = vmatprep.subr.mxu0 0.0
    %186 = vmatpush1.msra.mxu0 0.0
    %187 = vmatprep.subr.mxu0 0.0
    %188 = vmatpush1.msra.mxu0 0.0
    %189 = vmatprep.subr.mxu0 0.0
    %190 = vmatpush1.msra.mxu0 0.0
    %191 = vmatprep.subr.mxu0 0.0
    %192 = vmatpush1.msra.mxu0 0.0
    %193 = vmatprep.subr.mxu0 0.0
    %194 = vmatpush1.msra.mxu0 0.0
    %195 = vmatprep.subr.mxu0 0.0
    %196 = vmatpush1.msra.mxu0 0.0
    %197 = vmatprep.subr.mxu0 0.0
    %198 = vmatpush1.msra.mxu0 0.0
    %199 = vmatprep.subr.mxu0 0.0
    %200 = vmatpush1.msra.mxu0 0.0
    %201 = vmatprep.subr.mxu0 0.0
    %202 = vmatpush1.msra.mxu0 0.0
    %203 = vmatprep.subr.mxu0 0.0
    %204 = vmatpush1.msra.mxu0 0.0
    %205 = vmatprep.subr.mxu0 0.0
    %206 = vmatpush1.msra.mxu0 0.0
    %207 = vmatprep.subr.mxu0 0.0
    %208 = vmatpush1.msra.mxu0 0.0
    %209 = vmatprep.subr.mxu0 0.0
    %210 = vmatpush1.msra.mxu0 0.0
    %211 = vmatprep.subr.mxu0 0.0
    %212 = vmatpush1.msra.mxu0 0.0
    %213 = vmatprep.subr.mxu0 0.0
    %214 = vmatpush1.msra.mxu0 0.0
    %215 = vmatprep.subr.mxu0 0.0
    %216 = vmatpush1.msra.mxu0 0.0
    %217 = vmatprep.subr.mxu0 0.0
    %218 = vmatpush1.msra.mxu0 0.0
    %219 = vmatprep.subr.mxu0 0.0
    %220 = vmatpush1.msra.mxu0 0.0
    %221 = vmatprep.subr.mxu0 0.0
    %222 = vmatpush1.msra.mxu0 0.0
    %223 = vmatprep.subr.mxu0 0.0
    %224 = vmatpush1.msra.mxu0 0.0
    %225 = vmatprep.subr.mxu0 0.0
    %226 = vmatpush1.msra.mxu0 0.0
    %227 = vmatprep.subr.mxu0 0.0
    %228 = vmatpush1.msra.mxu0 0.0
    %229 = vmatprep.subr.mxu0 0.0
    %230 = vmatpush1.msra.mxu0 0.0
    %231 = vmatprep.subr.mxu0 0.0
    %232 = vmatpush1.msra.mxu0 0.0
    %233 = vmatprep.subr.mxu0 0.0
    %234 = vmatpush1.msra.mxu0 0.0
    %235 = vmatprep.subr.mxu0 0.0
    %236 = vmatpush1.msra.mxu0 0.0
    %237 = vmatprep.subr.mxu0 0.0
    %238 = vmatpush1.msra.mxu0 0.0
    %239 = vmatprep.mubr.f32.mxu0 0.0
    %240 = vmatmul.mubr.f32.gmra.mrb[0].mxu0 %v173
    %v241 = vpop.f32.mrb[0].mxu0
    %v242 = vadd.f32 %v169, %v241
    %v243 = vpop.f32.mrb[0].mxu0
    %244 = vdwg.mxu0
    %v245 = vld [vmem:[%s4] sm:$0x1]
    %v247 = vlaneseq
    %v248 = vshrl.u32 %v247, 7
    %v249 = vsub.s32 0, %v248
    %v250 = vrot.slane %v245, %v249
    %v252 = vadd.f32 %v242, %v250
    %253 = vmax.xlane.f32.xlu0 %v252
    %v254 = vpop.xlane.xlu0 %253
    %v255 = vsub.f32 %v252, %v254
    %v256 = vmul.f32 %v255, 1.442695
    %v257 = vpow.pop %v256
    %258 = vadd.xlane.f32.xlu0 %v257
    %v259 = vpop.xlane.xlu0 %258
    %v260 = vrcp.pop %v259
    %v261 = vmul.f32 %v257, %v260
    %v262 = vlaneseq
    %v263 = vshrl.u32 %v262, 7
    %v264 = vsub.s32 0, %v263
    %v265 = vrot.slane %v261, %v264
    %267 = vbcast.lane.b32.xlu0 %v265, 256
    %v268 = vpop.permute.xlu0 %267
    %s270 = sor.u32 256, 8
    %271 = vbcast.lane.b32.xlu0 %v265, %s270
    %v272 = vpop.permute.xlu0 %271
    %s274 = sor.u32 256, 16
    %275 = vbcast.lane.b32.xlu0 %v265, %s274
    %v276 = vpop.permute.xlu0 %275
    %s278 = sor.u32 256, 24
    %279 = vbcast.lane.b32.xlu0 %v265, %s278
    %v280 = vpop.permute.xlu0 %279
    %s282 = sor.u32 256, 32
    %283 = vbcast.lane.b32.xlu0 %v265, %s282
    %v284 = vpop.permute.xlu0 %283
    %s286 = sor.u32 256, 40
    %287 = vbcast.lane.b32.xlu0 %v265, %s286
    %v288 = vpop.permute.xlu0 %287
    %s290 = sor.u32 256, 48
    %291 = vbcast.lane.b32.xlu0 %v265, %s290
    %v292 = vpop.permute.xlu0 %291
    %s294 = sor.u32 256, 56
    %295 = vbcast.lane.b32.xlu0 %v265, %s294
    %v296 = vpop.permute.xlu0 %295
    %s298 = sor.u32 256, 64
    %299 = vbcast.lane.b32.xlu0 %v265, %s298
    %v300 = vpop.permute.xlu0 %299
    %s302 = sor.u32 256, 72
    %303 = vbcast.lane.b32.xlu0 %v265, %s302
    %v304 = vpop.permute.xlu0 %303
    %s306 = sor.u32 256, 80
    %307 = vbcast.lane.b32.xlu0 %v265, %s306
    %v308 = vpop.permute.xlu0 %307
    %s310 = sor.u32 256, 88
    %311 = vbcast.lane.b32.xlu0 %v265, %s310
    %v312 = vpop.permute.xlu0 %311
    %s314 = sor.u32 256, 96
    %315 = vbcast.lane.b32.xlu0 %v265, %s314
    %v316 = vpop.permute.xlu0 %315
    %s318 = sor.u32 256, 104
    %319 = vbcast.lane.b32.xlu0 %v265, %s318
    %v320 = vpop.permute.xlu0 %319
    %s322 = sor.u32 256, 112
    %323 = vbcast.lane.b32.xlu0 %v265, %s322
    %v324 = vpop.permute.xlu0 %323
    %s326 = sor.u32 256, 120
    %327 = vbcast.lane.b32.xlu0 %v265, %s326
    %v328 = vpop.permute.xlu0 %327
    %v329 = vlaneseq
    %v330 = vshrl.u32 %v329, 7
    %v331 = vsub.s32 1, %v330
    %v332 = vrot.slane %v261, %v331
    %334 = vbcast.lane.b32.xlu0 %v332, 256
    %v335 = vpop.permute.xlu0 %334
    %s337 = sor.u32 256, 8
    %338 = vbcast.lane.b32.xlu0 %v332, %s337
    %v339 = vpop.permute.xlu0 %338
    %s341 = sor.u32 256, 16
    %342 = vbcast.lane.b32.xlu0 %v332, %s341
    %v343 = vpop.permute.xlu0 %342
    %s345 = sor.u32 256, 24
    %346 = vbcast.lane.b32.xlu0 %v332, %s345
    %v347 = vpop.permute.xlu0 %346
    %s349 = sor.u32 256, 32
    %350 = vbcast.lane.b32.xlu0 %v332, %s349
    %v351 = vpop.permute.xlu0 %350
    %s353 = sor.u32 256, 40
    %354 = vbcast.lane.b32.xlu0 %v332, %s353
    %v355 = vpop.permute.xlu0 %354
    %s357 = sor.u32 256, 48
    %358 = vbcast.lane.b32.xlu0 %v332, %s357
    %v359 = vpop.permute.xlu0 %358
    %s361 = sor.u32 256, 56
    %362 = vbcast.lane.b32.xlu0 %v332, %s361
    %v363 = vpop.permute.xlu0 %362
    %s365 = sor.u32 256, 64
    %366 = vbcast.lane.b32.xlu0 %v332, %s365
    %v367 = vpop.permute.xlu0 %366
    %s369 = sor.u32 256, 72
    %370 = vbcast.lane.b32.xlu0 %v332, %s369
    %v371 = vpop.permute.xlu0 %370
    %s373 = sor.u32 256, 80
    %374 = vbcast.lane.b32.xlu0 %v332, %s373
    %v375 = vpop.permute.xlu0 %374
    %s377 = sor.u32 256, 88
    %378 = vbcast.lane.b32.xlu0 %v332, %s377
    %v379 = vpop.permute.xlu0 %378
    %s381 = sor.u32 256, 96
    %382 = vbcast.lane.b32.xlu0 %v332, %s381
    %v383 = vpop.permute.xlu0 %382
    %s385 = sor.u32 256, 104
    %386 = vbcast.lane.b32.xlu0 %v332, %s385
    %v387 = vpop.permute.xlu0 %386
    %s389 = sor.u32 256, 112
    %390 = vbcast.lane.b32.xlu0 %v332, %s389
    %v391 = vpop.permute.xlu0 %390
    %s393 = sor.u32 256, 120
    %394 = vbcast.lane.b32.xlu0 %v332, %s393
    %v395 = vpop.permute.xlu0 %394
    %v396 = vlaneseq
    %v397 = vshrl.u32 %v396, 7
    %v398 = vsub.s32 2, %v397
    %v399 = vrot.slane %v261, %v398
    %401 = vbcast.lane.b32.xlu0 %v399, 256
    %v402 = vpop.permute.xlu0 %401
    %s404 = sor.u32 256, 8
    %405 = vbcast.lane.b32.xlu0 %v399, %s404
    %v406 = vpop.permute.xlu0 %405
    %s408 = sor.u32 256, 16
    %409 = vbcast.lane.b32.xlu0 %v399, %s408
    %v410 = vpop.permute.xlu0 %409
    %s412 = sor.u32 256, 24
    %413 = vbcast.lane.b32.xlu0 %v399, %s412
    %v414 = vpop.permute.xlu0 %413
    %s416 = sor.u32 256, 32
    %417 = vbcast.lane.b32.xlu0 %v399, %s416
    %v418 = vpop.permute.xlu0 %417
    %s420 = sor.u32 256, 40
    %421 = vbcast.lane.b32.xlu0 %v399, %s420
    %v422 = vpop.permute.xlu0 %421
    %s424 = sor.u32 256, 48
    %425 = vbcast.lane.b32.xlu0 %v399, %s424
    %v426 = vpop.permute.xlu0 %425
    %s428 = sor.u32 256, 56
    %429 = vbcast.lane.b32.xlu0 %v399, %s428
    %v430 = vpop.permute.xlu0 %429
    %s432 = sor.u32 256, 64
    %433 = vbcast.lane.b32.xlu0 %v399, %s432
    %v434 = vpop.permute.xlu0 %433
    %s436 = sor.u32 256, 72
    %437 = vbcast.lane.b32.xlu0 %v399, %s436
    %v438 = vpop.permute.xlu0 %437
    %s440 = sor.u32 256, 80
    %441 = vbcast.lane.b32.xlu0 %v399, %s440
    %v442 = vpop.permute.xlu0 %441
    %s444 = sor.u32 256, 88
    %445 = vbcast.lane.b32.xlu0 %v399, %s444
    %v446 = vpop.permute.xlu0 %445
    %s448 = sor.u32 256, 96
    %449 = vbcast.lane.b32.xlu0 %v399, %s448
    %v450 = vpop.permute.xlu0 %449
    %s452 = sor.u32 256, 104
    %453 = vbcast.lane.b32.xlu0 %v399, %s452
    %v454 = vpop.permute.xlu0 %453
    %s456 = sor.u32 256, 112
    %457 = vbcast.lane.b32.xlu0 %v399, %s456
    %v458 = vpop.permute.xlu0 %457
    %s460 = sor.u32 256, 120
    %461 = vbcast.lane.b32.xlu0 %v399, %s460
    %v462 = vpop.permute.xlu0 %461
    %v463 = vlaneseq
    %v464 = vshrl.u32 %v463, 7
    %v465 = vsub.s32 3, %v464
    %v466 = vrot.slane %v261, %v465
    %468 = vbcast.lane.b32.xlu0 %v466, 256
    %v469 = vpop.permute.xlu0 %468
    %s471 = sor.u32 256, 8
    %472 = vbcast.lane.b32.xlu0 %v466, %s471
    %v473 = vpop.permute.xlu0 %472
    %s475 = sor.u32 256, 16
    %476 = vbcast.lane.b32.xlu0 %v466, %s475
    %v477 = vpop.permute.xlu0 %476
    %s479 = sor.u32 256, 24
    %480 = vbcast.lane.b32.xlu0 %v466, %s479
    %v481 = vpop.permute.xlu0 %480
    %s483 = sor.u32 256, 32
    %484 = vbcast.lane.b32.xlu0 %v466, %s483
    %v485 = vpop.permute.xlu0 %484
    %s487 = sor.u32 256, 40
    %488 = vbcast.lane.b32.xlu0 %v466, %s487
    %v489 = vpop.permute.xlu0 %488
    %s491 = sor.u32 256, 48
    %492 = vbcast.lane.b32.xlu0 %v466, %s491
    %v493 = vpop.permute.xlu0 %492
    %s495 = sor.u32 256, 56
    %496 = vbcast.lane.b32.xlu0 %v466, %s495
    %v497 = vpop.permute.xlu0 %496
    %s499 = sor.u32 256, 64
    %500 = vbcast.lane.b32.xlu0 %v466, %s499
    %v501 = vpop.permute.xlu0 %500
    %s503 = sor.u32 256, 72
    %504 = vbcast.lane.b32.xlu0 %v466, %s503
    %v505 = vpop.permute.xlu0 %504
    %s507 = sor.u32 256, 80
    %508 = vbcast.lane.b32.xlu0 %v466, %s507
    %v509 = vpop.permute.xlu0 %508
    %s511 = sor.u32 256, 88
    %512 = vbcast.lane.b32.xlu0 %v466, %s511
    %v513 = vpop.permute.xlu0 %512
    %s515 = sor.u32 256, 96
    %516 = vbcast.lane.b32.xlu0 %v466, %s515
    %v517 = vpop.permute.xlu0 %516
    %s519 = sor.u32 256, 104
    %520 = vbcast.lane.b32.xlu0 %v466, %s519
    %v521 = vpop.permute.xlu0 %520
    %s523 = sor.u32 256, 112
    %524 = vbcast.lane.b32.xlu0 %v466, %s523
    %v525 = vpop.permute.xlu0 %524
    %s527 = sor.u32 256, 120
    %528 = vbcast.lane.b32.xlu0 %v466, %s527
    %v529 = vpop.permute.xlu0 %528
    %v530 = vlaneseq
    %v531 = vshrl.u32 %v530, 7
    %v532 = vsub.s32 4, %v531
    %v533 = vrot.slane %v261, %v532
    %535 = vbcast.lane.b32.xlu0 %v533, 256
    %v536 = vpop.permute.xlu0 %535
    %s538 = sor.u32 256, 8
    %539 = vbcast.lane.b32.xlu0 %v533, %s538
    %v540 = vpop.permute.xlu0 %539
    %s542 = sor.u32 256, 16
    %543 = vbcast.lane.b32.xlu0 %v533, %s542
    %v544 = vpop.permute.xlu0 %543
    %s546 = sor.u32 256, 24
    %547 = vbcast.lane.b32.xlu0 %v533, %s546
    %v548 = vpop.permute.xlu0 %547
    %s550 = sor.u32 256, 32
    %551 = vbcast.lane.b32.xlu0 %v533, %s550
    %v552 = vpop.permute.xlu0 %551
    %s554 = sor.u32 256, 40
    %555 = vbcast.lane.b32.xlu0 %v533, %s554
    %v556 = vpop.permute.xlu0 %555
    %s558 = sor.u32 256, 48
    %559 = vbcast.lane.b32.xlu0 %v533, %s558
    %v560 = vpop.permute.xlu0 %559
    %s562 = sor.u32 256, 56
    %563 = vbcast.lane.b32.xlu0 %v533, %s562
    %v564 = vpop.permute.xlu0 %563
    %s566 = sor.u32 256, 64
    %567 = vbcast.lane.b32.xlu0 %v533, %s566
    %v568 = vpop.permute.xlu0 %567
    %s570 = sor.u32 256, 72
    %571 = vbcast.lane.b32.xlu0 %v533, %s570
    %v572 = vpop.permute.xlu0 %571
    %s574 = sor.u32 256, 80
    %575 = vbcast.lane.b32.xlu0 %v533, %s574
    %v576 = vpop.permute.xlu0 %575
    %s578 = sor.u32 256, 88
    %579 = vbcast.lane.b32.xlu0 %v533, %s578
    %v580 = vpop.permute.xlu0 %579
    %s582 = sor.u32 256, 96
    %583 = vbcast.lane.b32.xlu0 %v533, %s582
    %v584 = vpop.permute.xlu0 %583
    %s586 = sor.u32 256, 104
    %587 = vbcast.lane.b32.xlu0 %v533, %s586
    %v588 = vpop.permute.xlu0 %587
    %s590 = sor.u32 256, 112
    %591 = vbcast.lane.b32.xlu0 %v533, %s590
    %v592 = vpop.permute.xlu0 %591
    %s594 = sor.u32 256, 120
    %595 = vbcast.lane.b32.xlu0 %v533, %s594
    %v596 = vpop.permute.xlu0 %595
    %v597 = vlaneseq
    %v598 = vshrl.u32 %v597, 7
    %v599 = vsub.s32 5, %v598
    %v600 = vrot.slane %v261, %v599
    %602 = vbcast.lane.b32.xlu0 %v600, 256
    %v603 = vpop.permute.xlu0 %602
    %s605 = sor.u32 256, 8
    %606 = vbcast.lane.b32.xlu0 %v600, %s605
    %v607 = vpop.permute.xlu0 %606
    %s609 = sor.u32 256, 16
    %610 = vbcast.lane.b32.xlu0 %v600, %s609
    %v611 = vpop.permute.xlu0 %610
    %s613 = sor.u32 256, 24
    %614 = vbcast.lane.b32.xlu0 %v600, %s613
    %v615 = vpop.permute.xlu0 %614
    %s617 = sor.u32 256, 32
    %618 = vbcast.lane.b32.xlu0 %v600, %s617
    %v619 = vpop.permute.xlu0 %618
    %s621 = sor.u32 256, 40
    %622 = vbcast.lane.b32.xlu0 %v600, %s621
    %v623 = vpop.permute.xlu0 %622
    %s625 = sor.u32 256, 48
    %626 = vbcast.lane.b32.xlu0 %v600, %s625
    %v627 = vpop.permute.xlu0 %626
    %s629 = sor.u32 256, 56
    %630 = vbcast.lane.b32.xlu0 %v600, %s629
    %v631 = vpop.permute.xlu0 %630
    %s633 = sor.u32 256, 64
    %634 = vbcast.lane.b32.xlu0 %v600, %s633
    %v635 = vpop.permute.xlu0 %634
    %s637 = sor.u32 256, 72
    %638 = vbcast.lane.b32.xlu0 %v600, %s637
    %v639 = vpop.permute.xlu0 %638
    %s641 = sor.u32 256, 80
    %642 = vbcast.lane.b32.xlu0 %v600, %s641
    %v643 = vpop.permute.xlu0 %642
    %s645 = sor.u32 256, 88
    %646 = vbcast.lane.b32.xlu0 %v600, %s645
    %v647 = vpop.permute.xlu0 %646
    %s649 = sor.u32 256, 96
    %650 = vbcast.lane.b32.xlu0 %v600, %s649
    %v651 = vpop.permute.xlu0 %650
    %s653 = sor.u32 256, 104
    %654 = vbcast.lane.b32.xlu0 %v600, %s653
    %v655 = vpop.permute.xlu0 %654
    %s657 = sor.u32 256, 112
    %658 = vbcast.lane.b32.xlu0 %v600, %s657
    %v659 = vpop.permute.xlu0 %658
    %s661 = sor.u32 256, 120
    %662 = vbcast.lane.b32.xlu0 %v600, %s661
    %v663 = vpop.permute.xlu0 %662
    %v664 = vlaneseq
    %v665 = vshrl.u32 %v664, 7
    %v666 = vsub.s32 6, %v665
    %v667 = vrot.slane %v261, %v666
    %669 = vbcast.lane.b32.xlu0 %v667, 256
    %v670 = vpop.permute.xlu0 %669
    %s672 = sor.u32 256, 8
    %673 = vbcast.lane.b32.xlu0 %v667, %s672
    %v674 = vpop.permute.xlu0 %673
    %s676 = sor.u32 256, 16
    %677 = vbcast.lane.b32.xlu0 %v667, %s676
    %v678 = vpop.permute.xlu0 %677
    %s680 = sor.u32 256, 24
    %681 = vbcast.lane.b32.xlu0 %v667, %s680
    %v682 = vpop.permute.xlu0 %681
    %s684 = sor.u32 256, 32
    %685 = vbcast.lane.b32.xlu0 %v667, %s684
    %v686 = vpop.permute.xlu0 %685
    %s688 = sor.u32 256, 40
    %689 = vbcast.lane.b32.xlu0 %v667, %s688
    %v690 = vpop.permute.xlu0 %689
    %s692 = sor.u32 256, 48
    %693 = vbcast.lane.b32.xlu0 %v667, %s692
    %v694 = vpop.permute.xlu0 %693
    %s696 = sor.u32 256, 56
    %697 = vbcast.lane.b32.xlu0 %v667, %s696
    %v698 = vpop.permute.xlu0 %697
    %s700 = sor.u32 256, 64
    %701 = vbcast.lane.b32.xlu0 %v667, %s700
    %v702 = vpop.permute.xlu0 %701
    %s704 = sor.u32 256, 72
    %705 = vbcast.lane.b32.xlu0 %v667, %s704
    %v706 = vpop.permute.xlu0 %705
    %s708 = sor.u32 256, 80
    %709 = vbcast.lane.b32.xlu0 %v667, %s708
    %v710 = vpop.permute.xlu0 %709
    %s712 = sor.u32 256, 88
    %713 = vbcast.lane.b32.xlu0 %v667, %s712
    %v714 = vpop.permute.xlu0 %713
    %s716 = sor.u32 256, 96
    %717 = vbcast.lane.b32.xlu0 %v667, %s716
    %v718 = vpop.permute.xlu0 %717
    %s720 = sor.u32 256, 104
    %721 = vbcast.lane.b32.xlu0 %v667, %s720
    %v722 = vpop.permute.xlu0 %721
    %s724 = sor.u32 256, 112
    %725 = vbcast.lane.b32.xlu0 %v667, %s724
    %v726 = vpop.permute.xlu0 %725
    %s728 = sor.u32 256, 120
    %729 = vbcast.lane.b32.xlu0 %v667, %s728
    %v730 = vpop.permute.xlu0 %729
    %v731 = vlaneseq
    %v732 = vshrl.u32 %v731, 7
    %v733 = vsub.s32 7, %v732
    %v734 = vrot.slane %v261, %v733
    %736 = vbcast.lane.b32.xlu0 %v734, 256
    %v737 = vpop.permute.xlu0 %736
    %s739 = sor.u32 256, 8
    %740 = vbcast.lane.b32.xlu0 %v734, %s739
    %v741 = vpop.permute.xlu0 %740
    %s743 = sor.u32 256, 16
    %744 = vbcast.lane.b32.xlu0 %v734, %s743
    %v745 = vpop.permute.xlu0 %744
    %s747 = sor.u32 256, 24
    %748 = vbcast.lane.b32.xlu0 %v734, %s747
    %v749 = vpop.permute.xlu0 %748
    %s751 = sor.u32 256, 32
    %752 = vbcast.lane.b32.xlu0 %v734, %s751
    %v753 = vpop.permute.xlu0 %752
    %s755 = sor.u32 256, 40
    %756 = vbcast.lane.b32.xlu0 %v734, %s755
    %v757 = vpop.permute.xlu0 %756
    %s759 = sor.u32 256, 48
    %760 = vbcast.lane.b32.xlu0 %v734, %s759
    %v761 = vpop.permute.xlu0 %760
    %s763 = sor.u32 256, 56
    %764 = vbcast.lane.b32.xlu0 %v734, %s763
    %v765 = vpop.permute.xlu0 %764
    %s767 = sor.u32 256, 64
    %768 = vbcast.lane.b32.xlu0 %v734, %s767
    %v769 = vpop.permute.xlu0 %768
    %s771 = sor.u32 256, 72
    %772 = vbcast.lane.b32.xlu0 %v734, %s771
    %v773 = vpop.permute.xlu0 %772
    %s775 = sor.u32 256, 80
    %776 = vbcast.lane.b32.xlu0 %v734, %s775
    %v777 = vpop.permute.xlu0 %776
    %s779 = sor.u32 256, 88
    %780 = vbcast.lane.b32.xlu0 %v734, %s779
    %v781 = vpop.permute.xlu0 %780
    %s783 = sor.u32 256, 96
    %784 = vbcast.lane.b32.xlu0 %v734, %s783
    %v785 = vpop.permute.xlu0 %784
    %s787 = sor.u32 256, 104
    %788 = vbcast.lane.b32.xlu0 %v734, %s787
    %v789 = vpop.permute.xlu0 %788
    %s791 = sor.u32 256, 112
    %792 = vbcast.lane.b32.xlu0 %v734, %s791
    %v793 = vpop.permute.xlu0 %792
    %s795 = sor.u32 256, 120
    %796 = vbcast.lane.b32.xlu0 %v734, %s795
    %v797 = vpop.permute.xlu0 %796
    %v798 = vld [vmem:[#allocation10] sm:$0xff]
    %v799 = vld [vmem:[#allocation10 + $0x8] sm:$0xff]
    %v800 = vld [vmem:[#allocation10 + $0x10] sm:$0xff]
    %v801 = vld [vmem:[#allocation10 + $0x18] sm:$0xff]
    %v802 = vld [vmem:[#allocation10 + $0x20] sm:$0xff]
    %v803 = vld [vmem:[#allocation10 + $0x28] sm:$0xff]
    %v804 = vld [vmem:[#allocation10 + $0x30] sm:$0xff]
    %v805 = vld [vmem:[#allocation10 + $0x38] sm:$0xff]
    %v806 = vld [vmem:[#allocation10 + $0x40] sm:$0xff]
    %v807 = vld [vmem:[#allocation10 + $0x48] sm:$0xff]
    %v808 = vld [vmem:[#allocation10 + $0x50] sm:$0xff]
    %v809 = vld [vmem:[#allocation10 + $0x58] sm:$0xff]
    %v810 = vld [vmem:[#allocation10 + $0x60] sm:$0xff]
    %v811 = vld [vmem:[#allocation10 + $0x68] sm:$0xff]
    %v812 = vld [vmem:[#allocation10 + $0x70] sm:$0xff]
    %v813 = vld [vmem:[#allocation10 + $0x78] sm:$0xff]
    %v814 = vld [vmem:[#allocation10 + $0x80] sm:$0xff]
    %v815 = vld [vmem:[#allocation10 + $0x88] sm:$0xff]
    %v816 = vld [vmem:[#allocation10 + $0x90] sm:$0xff]
    %v817 = vld [vmem:[#allocation10 + $0x98] sm:$0xff]
    %v818 = vld [vmem:[#allocation10 + $0xa0] sm:$0xff]
    %v819 = vld [vmem:[#allocation10 + $0xa8] sm:$0xff]
    %v820 = vld [vmem:[#allocation10 + $0xb0] sm:$0xff]
    %v821 = vld [vmem:[#allocation10 + $0xb8] sm:$0xff]
    %v822 = vld [vmem:[#allocation10 + $0xc0] sm:$0xff]
    %v823 = vld [vmem:[#allocation10 + $0xc8] sm:$0xff]
    %v824 = vld [vmem:[#allocation10 + $0xd0] sm:$0xff]
    %v825 = vld [vmem:[#allocation10 + $0xd8] sm:$0xff]
    %v826 = vld [vmem:[#allocation10 + $0xe0] sm:$0xff]
    %v827 = vld [vmem:[#allocation10 + $0xe8] sm:$0xff]
    %v828 = vld [vmem:[#allocation10 + $0xf0] sm:$0xff]
    %v829 = vld [vmem:[#allocation10 + $0xf8] sm:$0xff]
    %v830 = vld [vmem:[#allocation10 + $0x100] sm:$0xff]
    %v831 = vld [vmem:[#allocation10 + $0x108] sm:$0xff]
    %v832 = vld [vmem:[#allocation10 + $0x110] sm:$0xff]
    %v833 = vld [vmem:[#allocation10 + $0x118] sm:$0xff]
    %v834 = vld [vmem:[#allocation10 + $0x120] sm:$0xff]
    %v835 = vld [vmem:[#allocation10 + $0x128] sm:$0xff]
    %v836 = vld [vmem:[#allocation10 + $0x130] sm:$0xff]
    %v837 = vld [vmem:[#allocation10 + $0x138] sm:$0xff]
    %v838 = vld [vmem:[#allocation10 + $0x140] sm:$0xff]
    %v839 = vld [vmem:[#allocation10 + $0x148] sm:$0xff]
    %v840 = vld [vmem:[#allocation10 + $0x150] sm:$0xff]
    %v841 = vld [vmem:[#allocation10 + $0x158] sm:$0xff]
    %v842 = vld [vmem:[#allocation10 + $0x160] sm:$0xff]
    %v843 = vld [vmem:[#allocation10 + $0x168] sm:$0xff]
    %v844 = vld [vmem:[#allocation10 + $0x170] sm:$0xff]
    %v845 = vld [vmem:[#allocation10 + $0x178] sm:$0xff]
    %v846 = vld [vmem:[#allocation10 + $0x180] sm:$0xff]
    %v847 = vld [vmem:[#allocation10 + $0x188] sm:$0xff]
    %v848 = vld [vmem:[#allocation10 + $0x190] sm:$0xff]
    %v849 = vld [vmem:[#allocation10 + $0x198] sm:$0xff]
    %v850 = vld [vmem:[#allocation10 + $0x1a0] sm:$0xff]
    %v851 = vld [vmem:[#allocation10 + $0x1a8] sm:$0xff]
    %v852 = vld [vmem:[#allocation10 + $0x1b0] sm:$0xff]
    %v853 = vld [vmem:[#allocation10 + $0x1b8] sm:$0xff]
    %v854 = vld [vmem:[#allocation10 + $0x1c0] sm:$0xff]
    %v855 = vld [vmem:[#allocation10 + $0x1c8] sm:$0xff]
    %v856 = vld [vmem:[#allocation10 + $0x1d0] sm:$0xff]
    %v857 = vld [vmem:[#allocation10 + $0x1d8] sm:$0xff]
    %v858 = vld [vmem:[#allocation10 + $0x1e0] sm:$0xff]
    %v859 = vld [vmem:[#allocation10 + $0x1e8] sm:$0xff]
    %v860 = vld [vmem:[#allocation10 + $0x1f0] sm:$0xff]
    %v861 = vld [vmem:[#allocation10 + $0x1f8] sm:$0xff]
    %v862 = vld [vmem:[#allocation10 + $0x200] sm:$0xff]
    %v863 = vld [vmem:[#allocation10 + $0x208] sm:$0xff]
    %v864 = vld [vmem:[#allocation10 + $0x210] sm:$0xff]
    %v865 = vld [vmem:[#allocation10 + $0x218] sm:$0xff]
    %v866 = vld [vmem:[#allocation10 + $0x220] sm:$0xff]
    %v867 = vld [vmem:[#allocation10 + $0x228] sm:$0xff]
    %v868 = vld [vmem:[#allocation10 + $0x230] sm:$0xff]
    %v869 = vld [vmem:[#allocation10 + $0x238] sm:$0xff]
    %v870 = vld [vmem:[#allocation10 + $0x240] sm:$0xff]
    %v871 = vld [vmem:[#allocation10 + $0x248] sm:$0xff]
    %v872 = vld [vmem:[#allocation10 + $0x250] sm:$0xff]
    %v873 = vld [vmem:[#allocation10 + $0x258] sm:$0xff]
    %v874 = vld [vmem:[#allocation10 + $0x260] sm:$0xff]
    %v875 = vld [vmem:[#allocation10 + $0x268] sm:$0xff]
    %v876 = vld [vmem:[#allocation10 + $0x270] sm:$0xff]
    %v877 = vld [vmem:[#allocation10 + $0x278] sm:$0xff]
    %v878 = vld [vmem:[#allocation10 + $0x280] sm:$0xff]
    %v879 = vld [vmem:[#allocation10 + $0x288] sm:$0xff]
    %v880 = vld [vmem:[#allocation10 + $0x290] sm:$0xff]
    %v881 = vld [vmem:[#allocation10 + $0x298] sm:$0xff]
    %v882 = vld [vmem:[#allocation10 + $0x2a0] sm:$0xff]
    %v883 = vld [vmem:[#allocation10 + $0x2a8] sm:$0xff]
    %v884 = vld [vmem:[#allocation10 + $0x2b0] sm:$0xff]
    %v885 = vld [vmem:[#allocation10 + $0x2b8] sm:$0xff]
    %v886 = vld [vmem:[#allocation10 + $0x2c0] sm:$0xff]
    %v887 = vld [vmem:[#allocation10 + $0x2c8] sm:$0xff]
    %v888 = vld [vmem:[#allocation10 + $0x2d0] sm:$0xff]
    %v889 = vld [vmem:[#allocation10 + $0x2d8] sm:$0xff]
    %v890 = vld [vmem:[#allocation10 + $0x2e0] sm:$0xff]
    %v891 = vld [vmem:[#allocation10 + $0x2e8] sm:$0xff]
    %v892 = vld [vmem:[#allocation10 + $0x2f0] sm:$0xff]
    %v893 = vld [vmem:[#allocation10 + $0x2f8] sm:$0xff]
    %v894 = vld [vmem:[#allocation10 + $0x300] sm:$0xff]
    %v895 = vld [vmem:[#allocation10 + $0x308] sm:$0xff]
    %v896 = vld [vmem:[#allocation10 + $0x310] sm:$0xff]
    %v897 = vld [vmem:[#allocation10 + $0x318] sm:$0xff]
    %v898 = vld [vmem:[#allocation10 + $0x320] sm:$0xff]
    %v899 = vld [vmem:[#allocation10 + $0x328] sm:$0xff]
    %v900 = vld [vmem:[#allocation10 + $0x330] sm:$0xff]
    %v901 = vld [vmem:[#allocation10 + $0x338] sm:$0xff]
    %v902 = vld [vmem:[#allocation10 + $0x340] sm:$0xff]
    %v903 = vld [vmem:[#allocation10 + $0x348] sm:$0xff]
    %v904 = vld [vmem:[#allocation10 + $0x350] sm:$0xff]
    %v905 = vld [vmem:[#allocation10 + $0x358] sm:$0xff]
    %v906 = vld [vmem:[#allocation10 + $0x360] sm:$0xff]
    %v907 = vld [vmem:[#allocation10 + $0x368] sm:$0xff]
    %v908 = vld [vmem:[#allocation10 + $0x370] sm:$0xff]
    %v909 = vld [vmem:[#allocation10 + $0x378] sm:$0xff]
    %v910 = vld [vmem:[#allocation10 + $0x380] sm:$0xff]
    %v911 = vld [vmem:[#allocation10 + $0x388] sm:$0xff]
    %v912 = vld [vmem:[#allocation10 + $0x390] sm:$0xff]
    %v913 = vld [vmem:[#allocation10 + $0x398] sm:$0xff]
    %v914 = vld [vmem:[#allocation10 + $0x3a0] sm:$0xff]
    %v915 = vld [vmem:[#allocation10 + $0x3a8] sm:$0xff]
    %v916 = vld [vmem:[#allocation10 + $0x3b0] sm:$0xff]
    %v917 = vld [vmem:[#allocation10 + $0x3b8] sm:$0xff]
    %v918 = vld [vmem:[#allocation10 + $0x3c0] sm:$0xff]
    %v919 = vld [vmem:[#allocation10 + $0x3c8] sm:$0xff]
    %v920 = vld [vmem:[#allocation10 + $0x3d0] sm:$0xff]
    %v921 = vld [vmem:[#allocation10 + $0x3d8] sm:$0xff]
    %v922 = vld [vmem:[#allocation10 + $0x3e0] sm:$0xff]
    %v923 = vld [vmem:[#allocation10 + $0x3e8] sm:$0xff]
    %v924 = vld [vmem:[#allocation10 + $0x3f0] sm:$0xff]
    %v925 = vld [vmem:[#allocation10 + $0x3f8] sm:$0xff]
    %v926 = vmul.f32 %v268, %v798
    %v927 = vmul.f32 %v272, %v799
    %v928 = vmul.f32 %v276, %v800
    %v929 = vmul.f32 %v280, %v801
    %v930 = vmul.f32 %v284, %v802
    %v931 = vmul.f32 %v288, %v803
    %v932 = vmul.f32 %v292, %v804
    %v933 = vmul.f32 %v296, %v805
    %v934 = vmul.f32 %v300, %v806
    %v935 = vmul.f32 %v304, %v807
    %v936 = vmul.f32 %v308, %v808
    %v937 = vmul.f32 %v312, %v809
    %v938 = vmul.f32 %v316, %v810
    %v939 = vmul.f32 %v320, %v811
    %v940 = vmul.f32 %v324, %v812
    %v941 = vmul.f32 %v328, %v813
    %v942 = vmul.f32 %v335, %v814
    %v943 = vmul.f32 %v339, %v815
    %v944 = vmul.f32 %v343, %v816
    %v945 = vmul.f32 %v347, %v817
    %v946 = vmul.f32 %v351, %v818
    %v947 = vmul.f32 %v355, %v819
    %v948 = vmul.f32 %v359, %v820
    %v949 = vmul.f32 %v363, %v821
    %v950 = vmul.f32 %v367, %v822
    %v951 = vmul.f32 %v371, %v823
    %v952 = vmul.f32 %v375, %v824
    %v953 = vmul.f32 %v379, %v825
    %v954 = vmul.f32 %v383, %v826
    %v955 = vmul.f32 %v387, %v827
    %v956 = vmul.f32 %v391, %v828
    %v957 = vmul.f32 %v395, %v829
    %v958 = vmul.f32 %v402, %v830
    %v959 = vmul.f32 %v406, %v831
    %v960 = vmul.f32 %v410, %v832
    %v961 = vmul.f32 %v414, %v833
    %v962 = vmul.f32 %v418, %v834
    %v963 = vmul.f32 %v422, %v835
    %v964 = vmul.f32 %v426, %v836
    %v965 = vmul.f32 %v430, %v837
    %v966 = vmul.f32 %v434, %v838
    %v967 = vmul.f32 %v438, %v839
    %v968 = vmul.f32 %v442, %v840
    %v969 = vmul.f32 %v446, %v841
    %v970 = vmul.f32 %v450, %v842
    %v971 = vmul.f32 %v454, %v843
    %v972 = vmul.f32 %v458, %v844
    %v973 = vmul.f32 %v462, %v845
    %v974 = vmul.f32 %v469, %v846
    %v975 = vmul.f32 %v473, %v847
    %v976 = vmul.f32 %v477, %v848
    %v977 = vmul.f32 %v481, %v849
    %v978 = vmul.f32 %v485, %v850
    %v979 = vmul.f32 %v489, %v851
    %v980 = vmul.f32 %v493, %v852
    %v981 = vmul.f32 %v497, %v853
    %v982 = vmul.f32 %v501, %v854
    %v983 = vmul.f32 %v505, %v855
    %v984 = vmul.f32 %v509, %v856
    %v985 = vmul.f32 %v513, %v857
    %v986 = vmul.f32 %v517, %v858
    %v987 = vmul.f32 %v521, %v859
    %v988 = vmul.f32 %v525, %v860
    %v989 = vmul.f32 %v529, %v861
    %v990 = vmul.f32 %v536, %v862
    %v991 = vmul.f32 %v540, %v863
    %v992 = vmul.f32 %v544, %v864
    %v993 = vmul.f32 %v548, %v865
    %v994 = vmul.f32 %v552, %v866
    %v995 = vmul.f32 %v556, %v867
    %v996 = vmul.f32 %v560, %v868
    %v997 = vmul.f32 %v564, %v869
    %v998 = vmul.f32 %v568, %v870
    %v999 = vmul.f32 %v572, %v871
    %v1000 = vmul.f32 %v576, %v872
    %v1001 = vmul.f32 %v580, %v873
    %v1002 = vmul.f32 %v584, %v874
    %v1003 = vmul.f32 %v588, %v875
    %v1004 = vmul.f32 %v592, %v876
    %v1005 = vmul.f32 %v596, %v877
    %v1006 = vmul.f32 %v603, %v878
    %v1007 = vmul.f32 %v607, %v879
    %v1008 = vmul.f32 %v611, %v880
    %v1009 = vmul.f32 %v615, %v881
    %v1010 = vmul.f32 %v619, %v882
    %v1011 = vmul.f32 %v623, %v883
    %v1012 = vmul.f32 %v627, %v884
    %v1013 = vmul.f32 %v631, %v885
    %v1014 = vmul.f32 %v635, %v886
    %v1015 = vmul.f32 %v639, %v887
    %v1016 = vmul.f32 %v643, %v888
    %v1017 = vmul.f32 %v647, %v889
    %v1018 = vmul.f32 %v651, %v890
    %v1019 = vmul.f32 %v655, %v891
    %v1020 = vmul.f32 %v659, %v892
    %v1021 = vmul.f32 %v663, %v893
    %v1022 = vmul.f32 %v670, %v894
    %v1023 = vmul.f32 %v674, %v895
    %v1024 = vmul.f32 %v678, %v896
    %v1025 = vmul.f32 %v682, %v897
    %v1026 = vmul.f32 %v686, %v898
    %v1027 = vmul.f32 %v690, %v899
    %v1028 = vmul.f32 %v694, %v900
    %v1029 = vmul.f32 %v698, %v901
    %v1030 = vmul.f32 %v702, %v902
    %v1031 = vmul.f32 %v706, %v903
    %v1032 = vmul.f32 %v710, %v904
    %v1033 = vmul.f32 %v714, %v905
    %v1034 = vmul.f32 %v718, %v906
    %v1035 = vmul.f32 %v722, %v907
    %v1036 = vmul.f32 %v726, %v908
    %v1037 = vmul.f32 %v730, %v909
    %v1038 = vmul.f32 %v737, %v910
    %v1039 = vmul.f32 %v741, %v911
    %v1040 = vmul.f32 %v745, %v912
    %v1041 = vmul.f32 %v749, %v913
    %v1042 = vmul.f32 %v753, %v914
    %v1043 = vmul.f32 %v757, %v915
    %v1044 = vmul.f32 %v761, %v916
    %v1045 = vmul.f32 %v765, %v917
    %v1046 = vmul.f32 %v769, %v918
    %v1047 = vmul.f32 %v773, %v919
    %v1048 = vmul.f32 %v777, %v920
    %v1049 = vmul.f32 %v781, %v921
    %v1050 = vmul.f32 %v785, %v922
    %v1051 = vmul.f32 %v789, %v923
    %v1052 = vmul.f32 %v793, %v924
    %v1053 = vmul.f32 %v797, %v925
    %v1054 = vadd.f32 %v926, %v927
    %v1055 = vadd.f32 %v1054, %v928
    %v1056 = vadd.f32 %v1055, %v929
    %v1057 = vadd.f32 %v1056, %v930
    %v1058 = vadd.f32 %v1057, %v931
    %v1059 = vadd.f32 %v1058, %v932
    %v1060 = vadd.f32 %v1059, %v933
    %v1061 = vadd.f32 %v1060, %v934
    %v1062 = vadd.f32 %v1061, %v935
    %v1063 = vadd.f32 %v1062, %v936
    %v1064 = vadd.f32 %v1063, %v937
    %v1065 = vadd.f32 %v1064, %v938
    %v1066 = vadd.f32 %v1065, %v939
    %v1067 = vadd.f32 %v1066, %v940
    %v1068 = vadd.f32 %v1067, %v941
    %v1069 = vrot.slane %v1068, 4
    %v1070 = vadd.f32 %v1068, %v1069
    %v1071 = vrot.slane %v1070, 2
    %v1072 = vadd.f32 %v1070, %v1071
    %v1073 = vrot.slane %v1072, 1
    %v1074 = vadd.f32 %v1072, %v1073
    %v1075 = vadd.f32 %v942, %v943
    %v1076 = vadd.f32 %v1075, %v944
    %v1077 = vadd.f32 %v1076, %v945
    %v1078 = vadd.f32 %v1077, %v946
    %v1079 = vadd.f32 %v1078, %v947
    %v1080 = vadd.f32 %v1079, %v948
    %v1081 = vadd.f32 %v1080, %v949
    %v1082 = vadd.f32 %v1081, %v950
    %v1083 = vadd.f32 %v1082, %v951
    %v1084 = vadd.f32 %v1083, %v952
    %v1085 = vadd.f32 %v1084, %v953
    %v1086 = vadd.f32 %v1085, %v954
    %v1087 = vadd.f32 %v1086, %v955
    %v1088 = vadd.f32 %v1087, %v956
    %v1089 = vadd.f32 %v1088, %v957
    %v1090 = vrot.slane %v1089, 4
    %v1091 = vadd.f32 %v1089, %v1090
    %v1092 = vrot.slane %v1091, 2
    %v1093 = vadd.f32 %v1091, %v1092
    %v1094 = vrot.slane %v1093, 1
    %v1095 = vadd.f32 %v1093, %v1094
    %v1096 = vadd.f32 %v958, %v959
    %v1097 = vadd.f32 %v1096, %v960
    %v1098 = vadd.f32 %v1097, %v961
    %v1099 = vadd.f32 %v1098, %v962
    %v1100 = vadd.f32 %v1099, %v963
    %v1101 = vadd.f32 %v1100, %v964
    %v1102 = vadd.f32 %v1101, %v965
    %v1103 = vadd.f32 %v1102, %v966
    %v1104 = vadd.f32 %v1103, %v967
    %v1105 = vadd.f32 %v1104, %v968
    %v1106 = vadd.f32 %v1105, %v969
    %v1107 = vadd.f32 %v1106, %v970
    %v1108 = vadd.f32 %v1107, %v971
    %v1109 = vadd.f32 %v1108, %v972
    %v1110 = vadd.f32 %v1109, %v973
    %v1111 = vrot.slane %v1110, 4
    %v1112 = vadd.f32 %v1110, %v1111
    %v1113 = vrot.slane %v1112, 2
    %v1114 = vadd.f32 %v1112, %v1113
    %v1115 = vrot.slane %v1114, 1
    %v1116 = vadd.f32 %v1114, %v1115
    %v1117 = vadd.f32 %v974, %v975
    %v1118 = vadd.f32 %v1117, %v976
    %v1119 = vadd.f32 %v1118, %v977
    %v1120 = vadd.f32 %v1119, %v978
    %v1121 = vadd.f32 %v1120, %v979
    %v1122 = vadd.f32 %v1121, %v980
    %v1123 = vadd.f32 %v1122, %v981
    %v1124 = vadd.f32 %v1123, %v982
    %v1125 = vadd.f32 %v1124, %v983
    %v1126 = vadd.f32 %v1125, %v984
    %v1127 = vadd.f32 %v1126, %v985
    %v1128 = vadd.f32 %v1127, %v986
    %v1129 = vadd.f32 %v1128, %v987
    %v1130 = vadd.f32 %v1129, %v988
    %v1131 = vadd.f32 %v1130, %v989
    %v1132 = vrot.slane %v1131, 4
    %v1133 = vadd.f32 %v1131, %v1132
    %v1134 = vrot.slane %v1133, 2
    %v1135 = vadd.f32 %v1133, %v1134
    %v1136 = vrot.slane %v1135, 1
    %v1137 = vadd.f32 %v1135, %v1136
    %v1138 = vadd.f32 %v990, %v991
    %v1139 = vadd.f32 %v1138, %v992
    %v1140 = vadd.f32 %v1139, %v993
    %v1141 = vadd.f32 %v1140, %v994
    %v1142 = vadd.f32 %v1141, %v995
    %v1143 = vadd.f32 %v1142, %v996
    %v1144 = vadd.f32 %v1143, %v997
    %v1145 = vadd.f32 %v1144, %v998
    %v1146 = vadd.f32 %v1145, %v999
    %v1147 = vadd.f32 %v1146, %v1000
    %v1148 = vadd.f32 %v1147, %v1001
    %v1149 = vadd.f32 %v1148, %v1002
    %v1150 = vadd.f32 %v1149, %v1003
    %v1151 = vadd.f32 %v1150, %v1004
    %v1152 = vadd.f32 %v1151, %v1005
    %v1153 = vrot.slane %v1152, 4
    %v1154 = vadd.f32 %v1152, %v1153
    %v1155 = vrot.slane %v1154, 2
    %v1156 = vadd.f32 %v1154, %v1155
    %v1157 = vrot.slane %v1156, 1
    %v1158 = vadd.f32 %v1156, %v1157
    %v1159 = vadd.f32 %v1006, %v1007
    %v1160 = vadd.f32 %v1159, %v1008
    %v1161 = vadd.f32 %v1160, %v1009
    %v1162 = vadd.f32 %v1161, %v1010
    %v1163 = vadd.f32 %v1162, %v1011
    %v1164 = vadd.f32 %v1163, %v1012
    %v1165 = vadd.f32 %v1164, %v1013
    %v1166 = vadd.f32 %v1165, %v1014
    %v1167 = vadd.f32 %v1166, %v1015
    %v1168 = vadd.f32 %v1167, %v1016
    %v1169 = vadd.f32 %v1168, %v1017
    %v1170 = vadd.f32 %v1169, %v1018
    %v1171 = vadd.f32 %v1170, %v1019
    %v1172 = vadd.f32 %v1171, %v1020
    %v1173 = vadd.f32 %v1172, %v1021
    %v1174 = vrot.slane %v1173, 4
    %v1175 = vadd.f32 %v1173, %v1174
    %v1176 = vrot.slane %v1175, 2
    %v1177 = vadd.f32 %v1175, %v1176
    %v1178 = vrot.slane %v1177, 1
    %v1179 = vadd.f32 %v1177, %v1178
    %v1180 = vadd.f32 %v1022, %v1023
    %v1181 = vadd.f32 %v1180, %v1024
    %v1182 = vadd.f32 %v1181, %v1025
    %v1183 = vadd.f32 %v1182, %v1026
    %v1184 = vadd.f32 %v1183, %v1027
    %v1185 = vadd.f32 %v1184, %v1028
    %v1186 = vadd.f32 %v1185, %v1029
    %v1187 = vadd.f32 %v1186, %v1030
    %v1188 = vadd.f32 %v1187, %v1031
    %v1189 = vadd.f32 %v1188, %v1032
    %v1190 = vadd.f32 %v1189, %v1033
    %v1191 = vadd.f32 %v1190, %v1034
    %v1192 = vadd.f32 %v1191, %v1035
    %v1193 = vadd.f32 %v1192, %v1036
    %v1194 = vadd.f32 %v1193, %v1037
    %v1195 = vrot.slane %v1194, 4
    %v1196 = vadd.f32 %v1194, %v1195
    %v1197 = vrot.slane %v1196, 2
    %v1198 = vadd.f32 %v1196, %v1197
    %v1199 = vrot.slane %v1198, 1
    %v1200 = vadd.f32 %v1198, %v1199
    %v1201 = vadd.f32 %v1038, %v1039
    %v1202 = vadd.f32 %v1201, %v1040
    %v1203 = vadd.f32 %v1202, %v1041
    %v1204 = vadd.f32 %v1203, %v1042
    %v1205 = vadd.f32 %v1204, %v1043
    %v1206 = vadd.f32 %v1205, %v1044
    %v1207 = vadd.f32 %v1206, %v1045
    %v1208 = vadd.f32 %v1207, %v1046
    %v1209 = vadd.f32 %v1208, %v1047
    %v1210 = vadd.f32 %v1209, %v1048
    %v1211 = vadd.f32 %v1210, %v1049
    %v1212 = vadd.f32 %v1211, %v1050
    %v1213 = vadd.f32 %v1212, %v1051
    %v1214 = vadd.f32 %v1213, %v1052
    %v1215 = vadd.f32 %v1214, %v1053
    %v1216 = vrot.slane %v1215, 4
    %v1217 = vadd.f32 %v1215, %v1216
    %v1218 = vrot.slane %v1217, 2
    %v1219 = vadd.f32 %v1217, %v1218
    %v1220 = vrot.slane %v1219, 1
    %v1221 = vadd.f32 %v1219, %v1220
    %vm1230 = vcmask 1041409
    %v1231 = vsel %vm1230, %v1095, %v1074
    %vm1232 = vcmask 1042434
    %v1233 = vsel %vm1232, %v1116, %v1231
    %vm1234 = vcmask 1043459
    %v1235 = vsel %vm1234, %v1137, %v1233
    %vm1236 = vcmask 1044484
    %v1237 = vsel %vm1236, %v1158, %v1235
    %vm1238 = vcmask 1045509
    %v1239 = vsel %vm1238, %v1179, %v1237
    %vm1240 = vcmask 1046534
    %v1241 = vsel %vm1240, %v1200, %v1239
    %vm1242 = vcmask 1047559
    %v1243 = vsel %vm1242, %v1221, %v1241
    %1245 = vst [vmem:[#allocation11] sm:$0xff] %v1243
    // Predicated region
    $region46: #{tpu_custom_call.1} parent=1 // pred_check
      _
    $region47: #{tpu_custom_call.1} parent=1 // pred_check_branch
      %1247 = sbr.rel (0) target = $region49
    $region48: #{tpu_custom_call.1} parent=1 // pred_region
      %s1249 = ssub.s32 128, 128
      %1250 = vsyncadd [#allocation4], %s1249
      %s1252 = sshll.u32 [#allocation11], 4
      %s1253 = int_to_ptr.vmem [resolvable:$true] %s1252
      %1255 = dma.vmem_to_hbm [thread:$0]  %s1253, 128, %s6, [#allocation4]
    $region49: #{tpu_custom_call.1} parent=1 // pred_fallthru
      _
    // Predicated region
    $region50: #{tpu_custom_call.1} parent=1 // pred_check
      _
    $region51: #{tpu_custom_call.1} parent=1 // pred_check_branch
      %1257 = sbr.rel (0) target = $region53
    $region52: #{tpu_custom_call.1} parent=1 // pred_region
      %1258 = dma.done [#allocation4], 128
    $region53: #{tpu_custom_call.1} parent=1 // pred_fallthru
      _
    %1259 = vsyncpa [#allocation3], 1
    %1260 = vsyncpa [#allocation6], 1
    %1261 = vsyncpa [#allocation9], 1
    %1262 = vsyncpa [#allocation4], 1

</llo_original>
